<compile_context>
chip_gen: v5e
topology: v5e:2x2
jax: 0.10.0
libtpu: 0.0.40
codegen_flags: <defaults>
</compile_context>

<pallas_src>
import jax
import jax.numpy as jnp
from jax import lax
from jax.experimental import pallas as pl
from jax.experimental.pallas import tpu as pltpu


_VMEM_TILE_BUDGET_BYTES = 40 * 1024 * 1024   # tiles + weights working set
_VMEM_LIMIT_BYTES = 48 * 1024 * 1024         # safe on v7x (64 MiB physical)


def _coattn_output_kernel(x1_ref, w1_ref, b1_ref,
                          x2_ref, w2_ref, b2_ref,
                          o1_ref, o2_ref):
    # PyTorch Linear: y = x @ W^T, W is [out, in].  Contract x's last dim with
    # W's last dim so the MXU consumes the PyTorch-layout weight directly.
    dn = (((1,), (1,)), ((), ()))
    y1 = lax.dot_general(x1_ref[...], w1_ref[...], dn,
                         preferred_element_type=jnp.float32)
    o1_ref[...] = (y1 + b1_ref[...].astype(jnp.float32)).astype(o1_ref.dtype)
    y2 = lax.dot_general(x2_ref[...], w2_ref[...], dn,
                         preferred_element_type=jnp.float32)
    o2_ref[...] = (y2 + b2_ref[...].astype(jnp.float32)).astype(o2_ref.dtype)


def _choose_row_tile(m, h, itemsize):
    """Pick TM (rows per grid step) that keeps double-buffered tiles + weights
    within the VMEM budget on all generations (v7x is the tightest, 64 MiB)."""
    # Weights for both streams, worst-case double-buffered.
    weight_bytes = 2 * 2 * h * h * itemsize
    avail = max(_VMEM_TILE_BUDGET_BYTES - weight_bytes, 1 << 20)
    # Per-row cost: 2 streams * (input + output) * 2 pipeline buffers.
    per_row_bytes = 2 * 2 * 2 * h * itemsize
    tm = avail // per_row_bytes
    tm = min(tm, 1024, max(m, 8))
    tm = max((tm // 8) * 8, 8)   # sublane-aligned
    return int(tm)


def co_attention_output(h1, h2, w1, b1, w2, b2,
                        hidden_dropout_prob=0.1, compute_dtype=None):
    """CoAttentionOutput forward.

    h1, h2 : [B, S, H] activations.
    w1, w2 : [H, H] PyTorch nn.Linear weights ([out_features, in_features]).
    b1, b2 : [H] biases.
    compute_dtype : optional matmul input dtype (e.g. jnp.bfloat16); the
        accumulation stays f32 and outputs keep the activation dtype.
    """
    del hidden_dropout_prob  # inference-mode dropout == identity
    B, S, H = h1.shape
    out_dtype1, out_dtype2 = h1.dtype, h2.dtype
    M = B * S

    if compute_dtype is not None:
        h1 = h1.astype(compute_dtype)
        h2 = h2.astype(compute_dtype)
        w1 = w1.astype(compute_dtype)
        w2 = w2.astype(compute_dtype)

    itemsize = jnp.dtype(h1.dtype).itemsize
    TM = _choose_row_tile(M, H, itemsize)
    Mp = pl.cdiv(M, TM) * TM

    x1 = h1.reshape(M, H)
    x2 = h2.reshape(M, H)
    if Mp != M:
        pad = ((0, Mp - M), (0, 0))
        x1 = jnp.pad(x1, pad)
        x2 = jnp.pad(x2, pad)
    b1r = b1.reshape(1, H)
    b2r = b2.reshape(1, H)

    row_spec = pl.BlockSpec((TM, H), lambda i: (i, 0))     # streamed row tiles
    w_spec = pl.BlockSpec((H, H), lambda i: (0, 0))        # VMEM-resident
    b_spec = pl.BlockSpec((1, H), lambda i: (0, 0))        # VMEM-resident

    out1, out2 = pl.pallas_call(
        _coattn_output_kernel,
        out_shape=(jax.ShapeDtypeStruct((Mp, H), out_dtype1),
                   jax.ShapeDtypeStruct((Mp, H), out_dtype2)),
        grid=(Mp // TM,),
        in_specs=[row_spec, w_spec, b_spec,
                  row_spec, w_spec, b_spec],
        out_specs=(row_spec, row_spec),
        compiler_params=pltpu.CompilerParams(
            dimension_semantics=("parallel",),
            vmem_limit_bytes=_VMEM_LIMIT_BYTES),
    )(x1, w1, b1r, x2, w2, b2r)

    if Mp != M:
        out1 = out1[:M]
        out2 = out2[:M]
    return out1.reshape(B, S, H), out2.reshape(B, S, H)


def _init_linear_params(key, hidden_dim, dtype=jnp.float32):
    """Deterministic init mimicking nn.Linear default (uniform +/- 1/sqrt(H))."""
    kw, kb = jax.random.split(key)
    bound = 1.0 / (hidden_dim ** 0.5)
    w = jax.random.uniform(kw, (hidden_dim, hidden_dim), dtype,
                           minval=-bound, maxval=bound)
    b = jax.random.uniform(kb, (hidden_dim,), dtype,
                           minval=-bound, maxval=bound)
    return w, b


if __name__ == "__main__":
    B, S, H = 2, 8, 32
    hidden_dropout_prob = 0.1

    key = jax.random.PRNGKey(0)
    k_h1, k_h2, k_d1, k_d2 = jax.random.split(key, 4)

    hidden_states1 = jax.random.normal(k_h1, (B, S, H), jnp.float32)
    hidden_states2 = jax.random.normal(k_h2, (B, S, H), jnp.float32)

    w1, b1 = _init_linear_params(k_d1, H)
    w2, b2 = _init_linear_params(k_d2, H)

    out1, out2 = co_attention_output(hidden_states1, hidden_states2,
                                     w1, b1, w2, b2, hidden_dropout_prob)
    jax.block_until_ready((out1, out2))

    # Pure-JAX reference check (eval-mode dropout == identity).
    ref1 = hidden_states1 @ w1.T + b1
    ref2 = hidden_states2 @ w2.T + b2
    assert out1.shape == (B, S, H) and out2.shape == (B, S, H)
    assert jnp.allclose(out1, ref1, atol=1e-5, rtol=1e-5)
    assert jnp.allclose(out2, ref2, atol=1e-5, rtol=1e-5)

    # Optional bf16 fast path (halved HBM traffic / bf16 MXU peak), looser tol.
    o1b, o2b = co_attention_output(hidden_states1, hidden_states2,
                                   w1, b1, w2, b2, hidden_dropout_prob,
                                   compute_dtype=jnp.bfloat16)
    jax.block_until_ready((o1b, o2b))
    assert jnp.allclose(o1b, ref1, atol=5e-2, rtol=5e-2)
    assert jnp.allclose(o2b, ref2, atol=5e-2, rtol=5e-2)

    print("KERNEL_OK")
</pallas_src>

<mosaic_0001>
module attributes {stable_mosaic.version = 11 : i64} {
  func.func @_coattn_output_kernel(%arg0: i32, %arg1: memref<16x32xf32, #tpu.memory_space<vmem>>, %arg2: memref<32x32xf32, #tpu.memory_space<vmem>>, %arg3: memref<1x32xf32, #tpu.memory_space<vmem>>, %arg4: memref<16x32xf32, #tpu.memory_space<vmem>>, %arg5: memref<32x32xf32, #tpu.memory_space<vmem>>, %arg6: memref<1x32xf32, #tpu.memory_space<vmem>>, %arg7: memref<16x32xf32, #tpu.memory_space<vmem>>, %arg8: memref<16x32xf32, #tpu.memory_space<vmem>>) attributes {dimension_semantics = [#tpu.dimension_semantics<parallel>], iteration_bounds = array<i64: 1>, scalar_prefetch = 0 : i64, scratch_operands = 0 : i64, tpu.core_type = #tpu.core_type<tc>, window_params = [{transform_indices = @transform_0, window_bounds = array<i64: 16, 32>}, {pipeline_mode = #tpu.pipeline_mode<synchronous>, transform_indices = @transform_1, window_bounds = array<i64: 32, 32>}, {pipeline_mode = #tpu.pipeline_mode<synchronous>, transform_indices = @transform_2, window_bounds = array<i64: 1, 32>}, {transform_indices = @transform_3, window_bounds = array<i64: 16, 32>}, {pipeline_mode = #tpu.pipeline_mode<synchronous>, transform_indices = @transform_4, window_bounds = array<i64: 32, 32>}, {pipeline_mode = #tpu.pipeline_mode<synchronous>, transform_indices = @transform_5, window_bounds = array<i64: 1, 32>}, {transform_indices = @transform_6, window_bounds = array<i64: 16, 32>}, {transform_indices = @transform_7, window_bounds = array<i64: 16, 32>}]} {
    %c0 = arith.constant 0 : index
    %c0_0 = arith.constant 0 : index
    %0 = vector.load %arg1[%c0, %c0_0] : memref<16x32xf32, #tpu.memory_space<vmem>>, vector<16x32xf32>
    %c0_1 = arith.constant 0 : index
    %c0_2 = arith.constant 0 : index
    %1 = vector.load %arg2[%c0_1, %c0_2] : memref<32x32xf32, #tpu.memory_space<vmem>>, vector<32x32xf32>
    %cst = arith.constant dense<0.000000e+00> : vector<16x32xf32>
    %2 = tpu.matmul %0, %1, %cst {dimension_numbers = #tpu.dot_dimension_numbers<[1], [1], [0], [0], [0, 0, 1, 0], [], []>} : vector<16x32xf32>, vector<32x32xf32>, vector<16x32xf32> -> vector<16x32xf32>
    %c0_3 = arith.constant 0 : index
    %c0_4 = arith.constant 0 : index
    %3 = vector.load %arg3[%c0_3, %c0_4] : memref<1x32xf32, #tpu.memory_space<vmem>>, vector<1x32xf32>
    %4 = vector.broadcast %3 : vector<1x32xf32> to vector<16x32xf32>
    %5 = arith.addf %2, %4 : vector<16x32xf32>
    %c0_5 = arith.constant 0 : index
    %c0_6 = arith.constant 0 : index
    %6 = vector.load %arg7[%c0_5, %c0_6] : memref<16x32xf32, #tpu.memory_space<vmem>>, vector<16x32xf32>
    tpu.vector_store %arg7[%c0_5, %c0_6], %5 {strides = array<i32>} : memref<16x32xf32, #tpu.memory_space<vmem>>, vector<16x32xf32>,
    %c0_7 = arith.constant 0 : index
    %c0_8 = arith.constant 0 : index
    %7 = vector.load %arg4[%c0_7, %c0_8] : memref<16x32xf32, #tpu.memory_space<vmem>>, vector<16x32xf32>
    %c0_9 = arith.constant 0 : index
    %c0_10 = arith.constant 0 : index
    %8 = vector.load %arg5[%c0_9, %c0_10] : memref<32x32xf32, #tpu.memory_space<vmem>>, vector<32x32xf32>
    %cst_11 = arith.constant dense<0.000000e+00> : vector<16x32xf32>
    %9 = tpu.matmul %7, %8, %cst_11 {dimension_numbers = #tpu.dot_dimension_numbers<[1], [1], [0], [0], [0, 0, 1, 0], [], []>} : vector<16x32xf32>, vector<32x32xf32>, vector<16x32xf32> -> vector<16x32xf32>
    %c0_12 = arith.constant 0 : index
    %c0_13 = arith.constant 0 : index
    %10 = vector.load %arg6[%c0_12, %c0_13] : memref<1x32xf32, #tpu.memory_space<vmem>>, vector<1x32xf32>
    %11 = vector.broadcast %10 : vector<1x32xf32> to vector<16x32xf32>
    %12 = arith.addf %9, %11 : vector<16x32xf32>
    %c0_14 = arith.constant 0 : index
    %c0_15 = arith.constant 0 : index
    %13 = vector.load %arg8[%c0_14, %c0_15] : memref<16x32xf32, #tpu.memory_space<vmem>>, vector<16x32xf32>
    tpu.vector_store %arg8[%c0_14, %c0_15], %12 {strides = array<i32>} : memref<16x32xf32, #tpu.memory_space<vmem>>, vector<16x32xf32>,
    return
  }
  func.func @transform_0(%arg0: i32) -> (i32, i32) {
    %c0_i32 = arith.constant 0 : i32
    %c0_i32_0 = arith.constant 0 : i32
    return %arg0, %c0_i32 : i32, i32
  }
  func.func @transform_1(%arg0: i32) -> (i32, i32) {
    %c0_i32 = arith.constant 0 : i32
    %c0_i32_0 = arith.constant 0 : i32
    %c0_i32_1 = arith.constant 0 : i32
    return %c0_i32, %c0_i32_0 : i32, i32
  }
  func.func @transform_2(%arg0: i32) -> (i32, i32) {
    %c0_i32 = arith.constant 0 : i32
    %c0_i32_0 = arith.constant 0 : i32
    %c0_i32_1 = arith.constant 0 : i32
    return %c0_i32, %c0_i32_0 : i32, i32
  }
  func.func @transform_3(%arg0: i32) -> (i32, i32) {
    %c0_i32 = arith.constant 0 : i32
    %c0_i32_0 = arith.constant 0 : i32
    return %arg0, %c0_i32 : i32, i32
  }
  func.func @transform_4(%arg0: i32) -> (i32, i32) {
    %c0_i32 = arith.constant 0 : i32
    %c0_i32_0 = arith.constant 0 : i32
    %c0_i32_1 = arith.constant 0 : i32
    return %c0_i32, %c0_i32_0 : i32, i32
  }
  func.func @transform_5(%arg0: i32) -> (i32, i32) {
    %c0_i32 = arith.constant 0 : i32
    %c0_i32_0 = arith.constant 0 : i32
    %c0_i32_1 = arith.constant 0 : i32
    return %c0_i32, %c0_i32_0 : i32, i32
  }
  func.func @transform_6(%arg0: i32) -> (i32, i32) {
    %c0_i32 = arith.constant 0 : i32
    %c0_i32_0 = arith.constant 0 : i32
    return %arg0, %c0_i32 : i32, i32
  }
  func.func @transform_7(%arg0: i32) -> (i32, i32) {
    %c0_i32 = arith.constant 0 : i32
    %c0_i32_0 = arith.constant 0 : i32
    return %arg0, %c0_i32 : i32, i32
  }
}

</mosaic_0001>

<llo_original>
// kernel: tpu_custom_call.1
$region0: #{tpu_custom_call.1}
  #allocation0 [shape = 'u32[]', space=smem, size = 0x4, offset = 0x4, fixed_abs, tag = 'smem constant byte address 0x4 - core index']
  #allocation1 [shape = 'u32[72,128]{1,0:T(1,128)}', space=vmem, size = 0x9000, scoped, tag = 'internal scratch']
  %s0 = inlined_call_operand.hbm [shape: f32[16,32], index: 0, kind: input, shape index: {}]
  %s1 = inlined_call_operand.hbm [shape: f32[32,32], index: 1, kind: input, shape index: {}]
  %s2 = inlined_call_operand.vmem [shape: f32[1,32], index: 2, kind: input, shape index: {}]
  %s3 = inlined_call_operand.hbm [shape: f32[16,32], index: 3, kind: input, shape index: {}]
  %s4 = inlined_call_operand.hbm [shape: f32[32,32], index: 4, kind: input, shape index: {}]
  %s5 = inlined_call_operand.vmem [shape: f32[1,32], index: 5, kind: input, shape index: {}]
  %s6 = inlined_call_operand.hbm [shape: f32[16,32], index: 6, kind: output, shape index: {0}]
  %s7 = inlined_call_operand.hbm [shape: f32[16,32], index: 7, kind: output, shape index: {1}]
  %8 = xla_tuple %s6, %s7
  %s9 = sld [smem:[#allocation0]]
  $region58: #{tpu_custom_call.1} parent=0
    _
  %s11 = ssub.s32 1, %s9
  %s12 = scalar_select 0, %s11, %s9
  $region1: #{tpu_custom_call.1} parent=0
    #allocation2 [shape = 'u8[8192]{0}', space=vmem, size = 0x2000, scoped, tag = 'input window, operand 0, single buffered']
    #allocation3 [shape = 's32[1]{0}', space=sflag, size = 0x4, scoped, tag = 'scoped memory for tpu_custom_call.1']
    #allocation4 [shape = 's32[1]{0}', space=sflag, size = 0x4, scoped, tag = 'scoped memory for tpu_custom_call.1']
    #allocation5 [shape = 'u8[16384]{0}', space=vmem, size = 0x4000, scoped, tag = 'input window, operand 1, single buffered']
    #allocation6 [shape = 's32[1]{0}', space=sflag, size = 0x4, scoped, tag = 'scoped memory for tpu_custom_call.1']
    #allocation7 [shape = 'u8[8192]{0}', space=vmem, size = 0x2000, scoped, tag = 'input window, operand 3, single buffered']
    #allocation8 [shape = 'u8[16384]{0}', space=vmem, size = 0x4000, scoped, tag = 'input window, operand 4, single buffered']
    #allocation9 [shape = 's32[1]{0}', space=sflag, size = 0x4, scoped, tag = 'scoped memory for tpu_custom_call.1']
    #allocation10 [shape = 'u8[8192]{0}', space=vmem, size = 0x2000, scoped, tag = 'output window, operand 0, single buffered']
    #allocation11 [shape = 'u8[8192]{0}', space=vmem, size = 0x2000, scoped, tag = 'output window, operand 1, single buffered']
    #allocation12 [shape = 's32[1]{0}', space=sflag, size = 0x4, scoped, tag = 'scoped memory for tpu_custom_call.1']
    %13 = vsyncpa [#allocation3], 0
    %14 = vsyncpa [#allocation6], 0
    %15 = vsyncpa [#allocation9], 0
    %16 = vsyncpa [#allocation4], 0
    %17 = vsyncpa [#allocation12], 0
    // Predicated region
    $region2: #{tpu_custom_call.1} parent=1 // pred_check
      _
    $region3: #{tpu_custom_call.1} parent=1 // pred_check_branch
      %19 = sbr.rel (0) target = $region5
    $region4: #{tpu_custom_call.1} parent=1 // pred_region
      %21 = vsyncadd [#allocation3], 0
      %s22 = sshll.u32 %s0, 4
      %s23 = int_to_ptr.hbm [resolvable:$true] %s22
      %s24 = sshll.u32 [#allocation2], 4
      %s25 = int_to_ptr.vmem [resolvable:$true] %s24
      %30 = dma.hbm_to_vmem [thread:$0]  %s23, 256, %s25, [#allocation3], 128, 128, 8
    $region5: #{tpu_custom_call.1} parent=1 // pred_fallthru
      _
    // Predicated region
    $region6: #{tpu_custom_call.1} parent=1 // pred_check
      _
    $region7: #{tpu_custom_call.1} parent=1 // pred_check_branch
      %32 = sbr.rel (0) target = $region9
    $region8: #{tpu_custom_call.1} parent=1 // pred_region
      %34 = vsyncadd [#allocation6], 0
      %s35 = sshll.u32 %s1, 4
      %s36 = int_to_ptr.hbm [resolvable:$true] %s35
      %s37 = sshll.u32 [#allocation5], 4
      %s38 = int_to_ptr.vmem [resolvable:$true] %s37
      %43 = dma.hbm_to_vmem [thread:$0]  %s36, 512, %s38, [#allocation6], 128, 128, 8
    $region9: #{tpu_custom_call.1} parent=1 // pred_fallthru
      _
    // Predicated region
    $region10: #{tpu_custom_call.1} parent=1 // pred_check
      _
    $region11: #{tpu_custom_call.1} parent=1 // pred_check_branch
      %45 = sbr.rel (0) target = $region13
    $region12: #{tpu_custom_call.1} parent=1 // pred_region
      _
    $region13: #{tpu_custom_call.1} parent=1 // pred_fallthru
      _
    // Predicated region
    $region14: #{tpu_custom_call.1} parent=1 // pred_check
      _
    $region15: #{tpu_custom_call.1} parent=1 // pred_check_branch
      %47 = sbr.rel (0) target = $region17
    $region16: #{tpu_custom_call.1} parent=1 // pred_region
      %49 = vsyncadd [#allocation6], 0
      %s50 = sshll.u32 %s3, 4
      %s51 = int_to_ptr.hbm [resolvable:$true] %s50
      %s52 = sshll.u32 [#allocation7], 4
      %s53 = int_to_ptr.vmem [resolvable:$true] %s52
      %58 = dma.hbm_to_vmem [thread:$0]  %s51, 256, %s53, [#allocation6], 128, 128, 8
    $region17: #{tpu_custom_call.1} parent=1 // pred_fallthru
      _
    // Predicated region
    $region18: #{tpu_custom_call.1} parent=1 // pred_check
      _
    $region19: #{tpu_custom_call.1} parent=1 // pred_check_branch
      %60 = sbr.rel (0) target = $region21
    $region20: #{tpu_custom_call.1} parent=1 // pred_region
      %62 = vsyncadd [#allocation9], 0
      %s63 = sshll.u32 %s4, 4
      %s64 = int_to_ptr.hbm [resolvable:$true] %s63
      %s65 = sshll.u32 [#allocation8], 4
      %s66 = int_to_ptr.vmem [resolvable:$true] %s65
      %71 = dma.hbm_to_vmem [thread:$0]  %s64, 512, %s66, [#allocation9], 128, 128, 8
    $region21: #{tpu_custom_call.1} parent=1 // pred_fallthru
      _
    // Predicated region
    $region22: #{tpu_custom_call.1} parent=1 // pred_check
      _
    $region23: #{tpu_custom_call.1} parent=1 // pred_check_branch
      %73 = sbr.rel (0) target = $region25
    $region24: #{tpu_custom_call.1} parent=1 // pred_region
      _
    $region25: #{tpu_custom_call.1} parent=1 // pred_fallthru
      _
    // Predicated region
    $region26: #{tpu_custom_call.1} parent=1 // pred_check
      _
    $region27: #{tpu_custom_call.1} parent=1 // pred_check_branch
      %75 = sbr.rel (0) target = $region29
    $region28: #{tpu_custom_call.1} parent=1 // pred_region
      %77 = dma.done [#allocation3], 256
    $region29: #{tpu_custom_call.1} parent=1 // pred_fallthru
      _
    // Predicated region
    $region30: #{tpu_custom_call.1} parent=1 // pred_check
      _
    $region31: #{tpu_custom_call.1} parent=1 // pred_check_branch
      %79 = sbr.rel (0) target = $region33
    $region32: #{tpu_custom_call.1} parent=1 // pred_region
      %81 = dma.done [#allocation6], 512
    $region33: #{tpu_custom_call.1} parent=1 // pred_fallthru
      _
    // Predicated region
    $region34: #{tpu_custom_call.1} parent=1 // pred_check
      _
    $region35: #{tpu_custom_call.1} parent=1 // pred_check_branch
      %83 = sbr.rel (0) target = $region37
    $region36: #{tpu_custom_call.1} parent=1 // pred_region
      %85 = dma.done [#allocation6], 256
    $region37: #{tpu_custom_call.1} parent=1 // pred_fallthru
      _
    // Predicated region
    $region38: #{tpu_custom_call.1} parent=1 // pred_check
      _
    $region39: #{tpu_custom_call.1} parent=1 // pred_check_branch
      %87 = sbr.rel (0) target = $region41
    $region40: #{tpu_custom_call.1} parent=1 // pred_region
      %89 = dma.done [#allocation9], 512
    $region41: #{tpu_custom_call.1} parent=1 // pred_fallthru
      _
    %v90 = vld [vmem:[#allocation2] sm:$0xff]
    %v91 = vld [vmem:[#allocation2 + $0x8] sm:$0xff]
    %v92 = vld [vmem:[#allocation5] sm:$0xff]
    %v93 = vld [vmem:[#allocation5 + $0x8] sm:$0xff]
    %v94 = vld [vmem:[#allocation5 + $0x10] sm:$0xff]
    %v95 = vld [vmem:[#allocation5 + $0x18] sm:$0xff]
    %v96 = vld [vmem:[%s2] sm:$0x1]
    %v98 = vperm.slane %v96, 0
    %vm100 = vcmask 261120
    %v102 = vsel %vm100, %v90, 0
    %v105 = vsel %vm100, %v91, 0
    %v108 = vsel %vm100, %v92, 0
    %v111 = vsel %vm100, %v93, 0
    %v114 = vsel %vm100, %v94, 0
    %v117 = vsel %vm100, %v95, 0
    %119 = vmatpush.xpose.msra.mxu0 0.0
    %120 = vmatpush.xpose.msra.mxu0 0.0
    %121 = vmatpush.xpose.msra.mxu0 0.0
    %122 = vmatpush.xpose.msra.mxu0 0.0
    %123 = vmatpush.xpose.msra.mxu0 0.0
    %124 = vmatpush.xpose.msra.mxu0 0.0
    %125 = vmatpush.xpose.msra.mxu0 0.0
    %126 = vmatpush.xpose.msra.mxu0 0.0
    %127 = vmatpush.xpose.msra.mxu0 0.0
    %128 = vmatpush.xpose.msra.mxu0 0.0
    %129 = vmatpush.xpose.msra.mxu0 0.0
    %130 = vmatpush.xpose.msra.mxu0 0.0
    %131 = vmatpush.xpose.msra.mxu0 %v117
    %132 = vmatpush.xpose.msra.mxu0 %v114
    %133 = vmatpush.xpose.msra.mxu0 %v111
    %134 = vmatpush.xpose.msra.mxu0 %v108
    %135 = vmatmul.f32.gmra.mxu0 %v102
    %v136 = vpop.f32.mrf.mxu0
    %v137 = vadd.f32 %v98, %v136
    %138 = vmatmul.f32.gmra.mxu0 %v105
    %v139 = vpop.f32.mrf.mxu0
    %v140 = vadd.f32 %v98, %v139
    %141 = vdwg.mxu0
    %142 = vst.msk [vmem:[#allocation10] sm:$0xff] %vm100, %v137
    %143 = vst.msk [vmem:[#allocation10 + $0x8] sm:$0xff] %vm100, %v140
    %v144 = vld [vmem:[#allocation7] sm:$0xff]
    %v145 = vld [vmem:[#allocation7 + $0x8] sm:$0xff]
    %v146 = vld [vmem:[#allocation8] sm:$0xff]
    %v147 = vld [vmem:[#allocation8 + $0x8] sm:$0xff]
    %v148 = vld [vmem:[#allocation8 + $0x10] sm:$0xff]
    %v149 = vld [vmem:[#allocation8 + $0x18] sm:$0xff]
    %v150 = vld [vmem:[%s5] sm:$0x1]
    %v152 = vperm.slane %v150, 0
    %v155 = vsel %vm100, %v144, 0
    %v158 = vsel %vm100, %v145, 0
    %v161 = vsel %vm100, %v146, 0
    %v164 = vsel %vm100, %v147, 0
    %v167 = vsel %vm100, %v148, 0
    %v170 = vsel %vm100, %v149, 0
    %172 = vmatpush.xpose.msra.mxu0 0.0
    %173 = vmatpush.xpose.msra.mxu0 0.0
    %174 = vmatpush.xpose.msra.mxu0 0.0
    %175 = vmatpush.xpose.msra.mxu0 0.0
    %176 = vmatpush.xpose.msra.mxu0 0.0
    %177 = vmatpush.xpose.msra.mxu0 0.0
    %178 = vmatpush.xpose.msra.mxu0 0.0
    %179 = vmatpush.xpose.msra.mxu0 0.0
    %180 = vmatpush.xpose.msra.mxu0 0.0
    %181 = vmatpush.xpose.msra.mxu0 0.0
    %182 = vmatpush.xpose.msra.mxu0 0.0
    %183 = vmatpush.xpose.msra.mxu0 0.0
    %184 = vmatpush.xpose.msra.mxu0 %v170
    %185 = vmatpush.xpose.msra.mxu0 %v167
    %186 = vmatpush.xpose.msra.mxu0 %v164
    %187 = vmatpush.xpose.msra.mxu0 %v161
    %188 = vmatmul.f32.gmra.mxu0 %v155
    %v189 = vpop.f32.mrf.mxu0
    %v190 = vadd.f32 %v152, %v189
    %191 = vmatmul.f32.gmra.mxu0 %v158
    %v192 = vpop.f32.mrf.mxu0
    %v193 = vadd.f32 %v152, %v192
    %194 = vdwg.mxu0
    %195 = vst.msk [vmem:[#allocation11] sm:$0xff] %vm100, %v190
    %196 = vst.msk [vmem:[#allocation11 + $0x8] sm:$0xff] %vm100, %v193
    // Predicated region
    $region42: #{tpu_custom_call.1} parent=1 // pred_check
      _
    $region43: #{tpu_custom_call.1} parent=1 // pred_check_branch
      %198 = sbr.rel (0) target = $region45
    $region44: #{tpu_custom_call.1} parent=1 // pred_region
      %200 = vsyncadd [#allocation4], 0
      %s201 = sshll.u32 [#allocation10], 4
      %s202 = int_to_ptr.vmem [resolvable:$true] %s201
      %s203 = sshll.u32 %s6, 4
      %s204 = int_to_ptr.hbm [resolvable:$true] %s203
      %209 = dma.vmem_to_hbm [thread:$0]  %s202, 256, %s204, [#allocation4], 128, 128, 8
    $region45: #{tpu_custom_call.1} parent=1 // pred_fallthru
      _
    // Predicated region
    $region46: #{tpu_custom_call.1} parent=1 // pred_check
      _
    $region47: #{tpu_custom_call.1} parent=1 // pred_check_branch
      %211 = sbr.rel (0) target = $region49
    $region48: #{tpu_custom_call.1} parent=1 // pred_region
      %213 = vsyncadd [#allocation12], 0
      %s214 = sshll.u32 [#allocation11], 4
      %s215 = int_to_ptr.vmem [resolvable:$true] %s214
      %s216 = sshll.u32 %s7, 4
      %s217 = int_to_ptr.hbm [resolvable:$true] %s216
      %222 = dma.vmem_to_hbm [thread:$0]  %s215, 256, %s217, [#allocation12], 128, 128, 8
    $region49: #{tpu_custom_call.1} parent=1 // pred_fallthru
      _
    // Predicated region
    $region50: #{tpu_custom_call.1} parent=1 // pred_check
      _
    $region51: #{tpu_custom_call.1} parent=1 // pred_check_branch
      %224 = sbr.rel (0) target = $region53
    $region52: #{tpu_custom_call.1} parent=1 // pred_region
      %226 = dma.done [#allocation4], 256
    $region53: #{tpu_custom_call.1} parent=1 // pred_fallthru
      _
    // Predicated region
    $region54: #{tpu_custom_call.1} parent=1 // pred_check
      _
    $region55: #{tpu_custom_call.1} parent=1 // pred_check_branch
      %228 = sbr.rel (0) target = $region57
    $region56: #{tpu_custom_call.1} parent=1 // pred_region
      %230 = dma.done [#allocation12], 256
    $region57: #{tpu_custom_call.1} parent=1 // pred_fallthru
      _
    %231 = vsyncpa [#allocation3], 1
    %232 = vsyncpa [#allocation6], 1
    %233 = vsyncpa [#allocation9], 1
    %234 = vsyncpa [#allocation4], 1
    %235 = vsyncpa [#allocation12], 1

</llo_original>
